<compile_context>
chip_gen: v7x
topology: tpu7x:2x2x1
jax: 0.10.0
libtpu: 0.0.40
codegen_flags: <defaults>
</compile_context>

<pallas_src>
import functools

import jax
import jax.numpy as jnp
from jax.experimental import pallas as pl
from jax.experimental.pallas import tpu as pltpu

IGNORE_INDEX = -100
_LANE = 128
_SUBLANE = 8


def _cdiv(a: int, b: int) -> int:
    return -(-a // b)


def _round_up(x: int, m: int) -> int:
    return ((x + m - 1) // m) * m


def _vmem_capacity_bytes() -> int:
    try:
        return int(pltpu.get_tpu_info().vmem_capacity_bytes)
    except Exception:
        return 64 * 1024 * 1024  # conservative fallback (v7x per-TC VMEM)


def _ce_kernel(logits_ref, tgt_ref, loss_ref, m_scr, s_scr, *, n_cols, tile_v):
    j = pl.program_id(1)          # V tile (reduction, arbitrary, last)

    @pl.when(j == 0)
    def _init():
        m_scr[...] = jnp.full_like(m_scr, -jnp.inf)
        s_scr[...] = jnp.zeros_like(s_scr)

    def update(x):
        # flash-style online log-sum-exp across V tiles
        m_blk = jnp.max(x, axis=-1, keepdims=True)
        m_new = jnp.maximum(m_scr[...], m_blk)
        s_scr[...] = (s_scr[...] * jnp.exp(m_scr[...] - m_new)
                      + jnp.sum(jnp.exp(x - m_new), axis=-1, keepdims=True))
        m_scr[...] = m_new

    if n_cols % tile_v != 0:
        # Ragged vocab edge: mask the padded lanes, but ONLY on the last tile.
        last = pl.num_programs(1) - 1
        n_valid = n_cols % tile_v  # static python int

        @pl.when(j != last)
        def _full():
            update(logits_ref[...].astype(jnp.float32))

        @pl.when(j == last)
        def _ragged():
            x = logits_ref[...].astype(jnp.float32)
            col = jax.lax.broadcasted_iota(jnp.int32, x.shape, 1)
            update(jnp.where(col < n_valid, x, -jnp.inf))
    else:
        update(logits_ref[...].astype(jnp.float32))

    @pl.when(j == pl.num_programs(1) - 1)
    def _finalize():
        # per-row: logsumexp(logits) - logits[label]; masking / mean in wrapper
        loss_ref[...] = jnp.log(s_scr[...]) + m_scr[...] - tgt_ref[...]


def cross_entropy_mean(logits: jax.Array, labels: jax.Array, *,
                       tile_n: int | None = None,
                       tile_v: int | None = None) -> jax.Array:
    """logits: (N, V) float; labels: (N,) int. Returns scalar mean CE loss."""
    N, V = logits.shape
    itemsize = jnp.dtype(logits.dtype).itemsize

    labels = labels.astype(jnp.int32)
    valid = labels != IGNORE_INDEX
    safe = jnp.where(valid, labels, 0)
    # Hoisted target-logit gather: O(N) HBM traffic, removes per-element
    # compare/select work from the O(N*V) kernel hot loop.
    tgt = jnp.take_along_axis(logits, safe[:, None], axis=-1).astype(jnp.float32)

    # --- VMEM budgeting ------------------------------------------------------
    vmem_limit = min(_vmem_capacity_bytes() * 3 // 4, 96 * 1024 * 1024)
    vmem_limit = max(vmem_limit, 16 * 1024 * 1024)
    # per_elem already carries the 2x double-buffer factor for the input block
    # plus the f32 upcast + one live f32 temp; spend ~80% of the limit on it.
    block_budget = int(vmem_limit * 0.8)
    per_elem = 2 * itemsize + 8

    if tile_v is None:
        if V <= _LANE or V * per_elem * 128 <= block_budget:
            tile_v = V                                  # full rows per block
        else:                                           # huge vocab: V-blocked
            max_tv = max(_LANE,
                         (block_budget // (256 * per_elem)) // _LANE * _LANE)
            max_tv = min(max_tv, (V // _LANE) * _LANE)
            tile_v = 0
            for step in (512, _LANE):   # prefer a tile_v that divides V
                cand = (max_tv // step) * step
                while cand >= step:
                    if V % cand == 0:
                        tile_v = cand
                        break
                    cand -= step
                if tile_v:
                    break
            if not tile_v:
                tile_v = max_tv
    tile_v = max(1, min(tile_v, V))

    if tile_n is None:
        tile_n = block_budget // (tile_v * per_elem)
        tile_n = min(tile_n, 2048)
        # keep >= 2 N tiles so both v7x TensorCores get work
        tile_n = min(tile_n, _round_up(_cdiv(N, 2), _SUBLANE))
    tile_n = min(tile_n, _round_up(N, _SUBLANE))
    tile_n = max(_SUBLANE, (tile_n // _SUBLANE) * _SUBLANE)

    num_n = _cdiv(N, tile_n)
    num_v = _cdiv(V, tile_v)
    n_pad = num_n * tile_n

    kernel = functools.partial(_ce_kernel, n_cols=V, tile_v=tile_v)

    per_row = pl.pallas_call(
        kernel,
        out_shape=jax.ShapeDtypeStruct((n_pad, 1), jnp.float32),
        grid_spec=pltpu.PrefetchScalarGridSpec(
            num_scalar_prefetch=0,
            grid=(num_n, num_v),
            in_specs=[
                pl.BlockSpec((tile_n, tile_v), lambda i, j: (i, j)),
                pl.BlockSpec((tile_n, 1), lambda i, j: (i, 0)),
            ],
            out_specs=pl.BlockSpec((tile_n, 1), lambda i, j: (i, 0)),
            scratch_shapes=[
                pltpu.VMEM((tile_n, 1), jnp.float32),   # running max
                pltpu.VMEM((tile_n, 1), jnp.float32),   # running sum-exp
            ],
        ),
        compiler_params=pltpu.CompilerParams(
            dimension_semantics=("parallel", "arbitrary"),
            vmem_limit_bytes=vmem_limit,
        ),
        cost_estimate=pl.CostEstimate(
            flops=6 * N * V,
            transcendentals=N * V,
            bytes_accessed=N * V * itemsize + 4 * N + 4 * n_pad,
        ),
    )(logits, tgt)

    per_row = per_row[:N, 0]
    denom = jnp.sum(valid.astype(jnp.float32))
    # If every label is ignored this is 0/0 == NaN, matching PyTorch.
    return jnp.sum(jnp.where(valid, per_row, 0.0)) / denom


class MLE:
    """Pallas-backed equivalent of the PyTorch MLE objective."""

    def forward(self, logits, labels, **kwargs):
        loss = cross_entropy_mean(logits, labels)
        return {"loss": loss, "logs": {}}

    __call__ = forward


if __name__ == "__main__":
    key = jax.random.PRNGKey(0)
    k1, k2, k3, k4, k5, k6, k7, k8 = jax.random.split(key, 8)

    def ref_loss(logits, labels):
        logp = jax.nn.log_softmax(logits.astype(jnp.float32), axis=-1)
        valid = labels != IGNORE_INDEX
        safe = jnp.where(valid, labels, 0)
        per = -jnp.take_along_axis(logp, safe[:, None], axis=-1)[:, 0]
        return jnp.sum(jnp.where(valid, per, 0.0)) / jnp.sum(valid)

    # --- test 1: module path (auto tiling, full-row blocks) -----------------
    N1, V1 = 16, 128
    logits1 = jax.random.normal(k1, (N1, V1), dtype=jnp.float32)
    labels1 = jax.random.randint(k2, (N1,), 0, V1, dtype=jnp.int32)
    labels1 = labels1.at[3].set(IGNORE_INDEX)   # exercise ignore_index

    out = MLE()(logits1, labels1)
    loss1 = jax.block_until_ready(out["loss"])
    ref1 = ref_loss(logits1, labels1)
    assert jnp.allclose(loss1, ref1, rtol=1e-5, atol=1e-5), (loss1, ref1)

    # --- test 2: V-blocked online-LSE path, tile_v divides V, ragged N ------
    N2, V2 = 13, 384
    logits2 = jax.random.normal(k3, (N2, V2), dtype=jnp.float32) * 3.0
    labels2 = jax.random.randint(k4, (N2,), 0, V2, dtype=jnp.int32)
    labels2 = labels2.at[0].set(IGNORE_INDEX)

    loss2 = jax.block_until_ready(
        cross_entropy_mean(logits2, labels2, tile_n=8, tile_v=128))
    ref2 = ref_loss(logits2, labels2)
    assert jnp.allclose(loss2, ref2, rtol=1e-5, atol=1e-5), (loss2, ref2)

    # --- test 3: ragged last V tile (mask applied only on final tile) -------
    N3, V3 = 12, 200
    logits3 = jax.random.normal(k5, (N3, V3), dtype=jnp.float32) * 2.0
    labels3 = jax.random.randint(k6, (N3,), 0, V3, dtype=jnp.int32)
    labels3 = labels3.at[5].set(IGNORE_INDEX)

    loss3 = jax.block_until_ready(
        cross_entropy_mean(logits3, labels3, tile_n=8, tile_v=128))
    ref3 = ref_loss(logits3, labels3)
    assert jnp.allclose(loss3, ref3, rtol=1e-5, atol=1e-5), (loss3, ref3)

    # --- test 4: bf16 logits (upcast path), auto tiling ----------------------
    N4, V4 = 16, 256
    logits4 = (jax.random.normal(k7, (N4, V4), dtype=jnp.float32)
               .astype(jnp.bfloat16))
    labels4 = jax.random.randint(k8, (N4,), 0, V4, dtype=jnp.int32)

    loss4 = jax.block_until_ready(cross_entropy_mean(logits4, labels4))
    ref4 = ref_loss(logits4, labels4)
    assert jnp.allclose(loss4, ref4, rtol=1e-3, atol=1e-3), (loss4, ref4)

    print("KERNEL_OK")
</pallas_src>

<mosaic_0001>
module attributes {stable_mosaic.version = 11 : i64} {
  func.func @_ce_kernel(%arg0: i32, %arg1: i32, %arg2: memref<8x128xf32, #tpu.memory_space<vmem>>, %arg3: memref<8x1xf32, #tpu.memory_space<vmem>>, %arg4: memref<8x1xf32, #tpu.memory_space<vmem>>, %arg5: memref<8x1xf32, #tpu.memory_space<vmem>>, %arg6: memref<8x1xf32, #tpu.memory_space<vmem>>) attributes {dimension_semantics = [#tpu.dimension_semantics<parallel>, #tpu.dimension_semantics<arbitrary>], iteration_bounds = array<i64: 2, 1>, scalar_prefetch = 0 : i64, scratch_operands = 2 : i64, tpu.core_type = #tpu.core_type<tc>, window_params = [{transform_indices = @transform_0, window_bounds = array<i64: 8, 128>}, {transform_indices = @transform_1, window_bounds = array<i64: 8, 1>}, {transform_indices = @transform_2, window_bounds = array<i64: 8, 1>}]} {
    %c0_i32 = arith.constant 0 : i32
    %0 = arith.cmpi eq, %arg1, %c0_i32 : i32
    %1 = arith.extui %0 : i1 to i32
    %c0_i32_0 = arith.constant 0 : i32
    %2 = arith.cmpi ne, %1, %c0_i32_0 : i32
    scf.if %2 {
      %cst_15 = arith.constant 0xFF800000 : f32
      %24 = vector.broadcast %cst_15 : f32 to vector<8x1xf32>
      %c0_16 = arith.constant 0 : index
      %c0_17 = arith.constant 0 : index
      %25 = vector.load %arg5[%c0_16, %c0_17] : memref<8x1xf32, #tpu.memory_space<vmem>>, vector<8x1xf32>
      tpu.vector_store %arg5[%c0_16, %c0_17], %24 {strides = array<i32>} : memref<8x1xf32, #tpu.memory_space<vmem>>, vector<8x1xf32>,
      %cst_18 = arith.constant 0.000000e+00 : f32
      %26 = vector.broadcast %cst_18 : f32 to vector<8x1xf32>
      %c0_19 = arith.constant 0 : index
      %c0_20 = arith.constant 0 : index
      %27 = vector.load %arg6[%c0_19, %c0_20] : memref<8x1xf32, #tpu.memory_space<vmem>>, vector<8x1xf32>
      tpu.vector_store %arg6[%c0_19, %c0_20], %26 {strides = array<i32>} : memref<8x1xf32, #tpu.memory_space<vmem>>, vector<8x1xf32>,
    } else {
    }
    %c0 = arith.constant 0 : index
    %c0_1 = arith.constant 0 : index
    %3 = vector.load %arg2[%c0, %c0_1] : memref<8x128xf32, #tpu.memory_space<vmem>>, vector<8x128xf32>
    %cst = arith.constant dense<0xFF800000> : vector<8xf32>
    %4 = vector.multi_reduction <maximumf>, %3, %cst [1] : vector<8x128xf32> to vector<8xf32>
    %5 = vector.shape_cast %4 : vector<8xf32> to vector<8x1xf32>
    %c0_2 = arith.constant 0 : index
    %c0_3 = arith.constant 0 : index
    %6 = vector.load %arg5[%c0_2, %c0_3] : memref<8x1xf32, #tpu.memory_space<vmem>>, vector<8x1xf32>
    %7 = arith.maximumf %6, %5 : vector<8x1xf32>
    %c0_4 = arith.constant 0 : index
    %c0_5 = arith.constant 0 : index
    %8 = vector.load %arg6[%c0_4, %c0_5] : memref<8x1xf32, #tpu.memory_space<vmem>>, vector<8x1xf32>
    %c0_6 = arith.constant 0 : index
    %c0_7 = arith.constant 0 : index
    %9 = vector.load %arg5[%c0_6, %c0_7] : memref<8x1xf32, #tpu.memory_space<vmem>>, vector<8x1xf32>
    %10 = arith.subf %9, %7 : vector<8x1xf32>
    %11 = math.exp %10 : vector<8x1xf32>
    %12 = arith.mulf %8, %11 : vector<8x1xf32>
    %13 = vector.broadcast %7 : vector<8x1xf32> to vector<8x128xf32>
    %14 = arith.subf %3, %13 : vector<8x128xf32>
    %15 = math.exp %14 : vector<8x128xf32>
    %cst_8 = arith.constant dense<0.000000e+00> : vector<8xf32>
    %16 = vector.multi_reduction <add>, %15, %cst_8 [1] : vector<8x128xf32> to vector<8xf32>
    %17 = vector.shape_cast %16 : vector<8xf32> to vector<8x1xf32>
    %18 = arith.addf %12, %17 : vector<8x1xf32>
    %c0_9 = arith.constant 0 : index
    %c0_10 = arith.constant 0 : index
    %19 = vector.load %arg6[%c0_9, %c0_10] : memref<8x1xf32, #tpu.memory_space<vmem>>, vector<8x1xf32>
    tpu.vector_store %arg6[%c0_9, %c0_10], %18 {strides = array<i32>} : memref<8x1xf32, #tpu.memory_space<vmem>>, vector<8x1xf32>,
    %c0_11 = arith.constant 0 : index
    %c0_12 = arith.constant 0 : index
    %20 = vector.load %arg5[%c0_11, %c0_12] : memref<8x1xf32, #tpu.memory_space<vmem>>, vector<8x1xf32>
    tpu.vector_store %arg5[%c0_11, %c0_12], %7 {strides = array<i32>} : memref<8x1xf32, #tpu.memory_space<vmem>>, vector<8x1xf32>,
    %c0_i32_13 = arith.constant 0 : i32
    %21 = arith.cmpi eq, %arg1, %c0_i32_13 : i32
    %22 = arith.extui %21 : i1 to i32
    %c0_i32_14 = arith.constant 0 : i32
    %23 = arith.cmpi ne, %22, %c0_i32_14 : i32
    scf.if %23 {
      %c0_15 = arith.constant 0 : index
      %c0_16 = arith.constant 0 : index
      %24 = vector.load %arg6[%c0_15, %c0_16] : memref<8x1xf32, #tpu.memory_space<vmem>>, vector<8x1xf32>
      %25 = math.log %24 : vector<8x1xf32>
      %c0_17 = arith.constant 0 : index
      %c0_18 = arith.constant 0 : index
      %26 = vector.load %arg5[%c0_17, %c0_18] : memref<8x1xf32, #tpu.memory_space<vmem>>, vector<8x1xf32>
      %27 = arith.addf %25, %26 : vector<8x1xf32>
      %c0_19 = arith.constant 0 : index
      %c0_20 = arith.constant 0 : index
      %28 = vector.load %arg3[%c0_19, %c0_20] : memref<8x1xf32, #tpu.memory_space<vmem>>, vector<8x1xf32>
      %29 = arith.subf %27, %28 : vector<8x1xf32>
      %c0_21 = arith.constant 0 : index
      %c0_22 = arith.constant 0 : index
      %30 = vector.load %arg4[%c0_21, %c0_22] : memref<8x1xf32, #tpu.memory_space<vmem>>, vector<8x1xf32>
      tpu.vector_store %arg4[%c0_21, %c0_22], %29 {strides = array<i32>} : memref<8x1xf32, #tpu.memory_space<vmem>>, vector<8x1xf32>,
    } else {
    }
    return
  }
  func.func @transform_0(%arg0: i32, %arg1: i32) -> (i32, i32) {
    %c0_i32 = arith.constant 0 : i32
    return %arg0, %arg1 : i32, i32
  }
  func.func @transform_1(%arg0: i32, %arg1: i32) -> (i32, i32) {
    %c0_i32 = arith.constant 0 : i32
    %c0_i32_0 = arith.constant 0 : i32
    return %arg0, %c0_i32 : i32, i32
  }
  func.func @transform_2(%arg0: i32, %arg1: i32) -> (i32, i32) {
    %c0_i32 = arith.constant 0 : i32
    %c0_i32_0 = arith.constant 0 : i32
    return %arg0, %c0_i32 : i32, i32
  }
}

</mosaic_0001>

<llo_original>
// kernel: tpu_custom_call.1
$region0: #{tpu_custom_call.1}
  #allocation0 [shape = 'u32[]', space=smem, size = 0x4, offset = 0x4, fixed_abs, tag = 'smem constant byte address 0x4 - core index']
  #allocation1 [shape = 'u32[144,128]{1,0:T(1,128)}', space=vmem, size = 0x12000, scoped, tag = 'internal scratch']
  #allocation2 [shape = 'f32[8,1]{1,0:T(8,128)}', space=vmem, size = 0x1000, scoped, tag = 'scratch operand']
  #allocation3 [shape = 'f32[8,1]{1,0:T(8,128)}', space=vmem, size = 0x1000, scoped, tag = 'scratch operand']
  %s0 = inlined_call_operand.vmem [shape: f32[16,128], index: 0, kind: input, shape index: {}]
  %s1 = inlined_call_operand.vmem [shape: f32[16,1], index: 1, kind: input, shape index: {}]
  %s2 = inlined_call_operand.vmem [shape: f32[16,1], index: 2, kind: output, shape index: {}]
  %s3 = sld [smem:[#allocation0]]
  $region49: #{tpu_custom_call.1} parent=0
    _
  %s5 = ssub.s32 1, %s3
  %s6 = scalar_select 0, %s5, %s3
  loop: start=0, step=1, limit=4
  $region2: #{tpu_custom_call.1} parent=0 // loop_pre_header
    _
  $region3: #{tpu_custom_call.1} parent=0 // loop_header
    %s8 = sphi 0, %s12
    %p9 = scmp.ge.s32.totalorder %s8, 4
    %s15 = sphi 0, %s27
    %s16 = sphi 0, %s23
    %s17 = sphi 0, %s15
    %s18 = sphi 0, %s16
    %s19 = sphi 0, %s17
    %s20 = sphi 0, %s18
    %s32 = sphi 0, %s34
    %s35 = sphi 0, %s32
    %s36 = sphi 0, %s35
    %s52 = sphi 0, %s36
    %s58 = sphi 0, %s60
    %s61 = sphi 0, %s58
    %s62 = sphi 0, %s61
    %s78 = sphi 0, %s62
    %s84 = sphi 0, %s86
    %s87 = sphi 0, %s84
    %s88 = sphi 0, %s87
    %s104 = sphi 0, %s88
  $region4: #{tpu_custom_call.1} parent=0 // loop_header_branch
    %11 = sbr.rel (%p9) target = $region8
  $region5: #{tpu_custom_call.1} parent=0 // loop_body
    %s13 = ssub.s32 %s8, 1
    %s14 = ssub.s32 %s8, 2
    %s21 = sadd.s32 1, %s16
    %p22 = scmp.ge.s32.totalorder %s21, 1
    %s23 = scalar_select %p22, 0, %s21
    %s24 = sadd.s32 1, %s15
    %s25 = scalar_select %p22, %s24, %s15
    %p26 = scmp.ge.s32.totalorder %s25, 2
    %s27 = scalar_select %p26, 0, %s25
    %s28 = ssub.s32 %s15, %s27
    %s29 = ssub.s32 %s16, %s23
    %s30 = sor.u32 %s28, %s29
    %p31 = scmp.eq.s32.totalorder %s30, 0
    %s33 = sadd.s32 %s32, 1
    %s34 = scalar_select %p31, %s32, %s33
    %p37 = pneg %p31
    %p38 = scmp.eq.s32.totalorder %s8, 1
    %p39 = por %p37, %p38
    %p40 = scmp.ne.s32.totalorder %s32, %s35
    %p41 = scmp.eq.s32.totalorder %s8, 0
    %p42 = por %p40, %p41
    %p43 = scmp.ne.s32.totalorder %s32, %s35
    %p44 = scmp.eq.s32.totalorder %s13, 1
    %p45 = por %p43, %p44
    %p46 = scmp.ne.s32.totalorder %s35, %s36
    %p47 = scmp.eq.s32.totalorder %s13, 0
    %p48 = por %p46, %p47
    %p49 = scmp.ne.s32.totalorder %s35, %s36
    %p50 = scmp.eq.s32.totalorder %s14, 1
    %p51 = por %p49, %p50
    %p53 = scmp.ne.s32.totalorder %s36, %s52
    %p54 = scmp.eq.s32.totalorder %s14, 0
    %p55 = por %p53, %p54
    %s56 = ssub.s32 %s15, %s27
    %p57 = scmp.eq.s32.totalorder %s56, 0
    %s59 = sadd.s32 %s58, 1
    %s60 = scalar_select %p57, %s58, %s59
    %p63 = pneg %p57
    %p64 = scmp.eq.s32.totalorder %s8, 1
    %p65 = por %p63, %p64
    %p66 = scmp.ne.s32.totalorder %s58, %s61
    %p67 = scmp.eq.s32.totalorder %s8, 0
    %p68 = por %p66, %p67
    %p69 = scmp.ne.s32.totalorder %s58, %s61
    %p70 = scmp.eq.s32.totalorder %s13, 1
    %p71 = por %p69, %p70
    %p72 = scmp.ne.s32.totalorder %s61, %s62
    %p73 = scmp.eq.s32.totalorder %s13, 0
    %p74 = por %p72, %p73
    %p75 = scmp.ne.s32.totalorder %s61, %s62
    %p76 = scmp.eq.s32.totalorder %s14, 1
    %p77 = por %p75, %p76
    %p79 = scmp.ne.s32.totalorder %s62, %s78
    %p80 = scmp.eq.s32.totalorder %s14, 0
    %p81 = por %p79, %p80
    %s82 = ssub.s32 %s15, %s27
    %p83 = scmp.eq.s32.totalorder %s82, 0
    %s85 = sadd.s32 %s84, 1
    %s86 = scalar_select %p83, %s84, %s85
    %p89 = pneg %p83
    %p90 = scmp.eq.s32.totalorder %s8, 1
    %p91 = por %p89, %p90
    %p92 = scmp.ne.s32.totalorder %s84, %s87
    %p93 = scmp.eq.s32.totalorder %s8, 0
    %p94 = por %p92, %p93
    %p95 = scmp.ne.s32.totalorder %s84, %s87
    %p96 = scmp.eq.s32.totalorder %s13, 1
    %p97 = por %p95, %p96
    %p98 = scmp.ne.s32.totalorder %s87, %s88
    %p99 = scmp.eq.s32.totalorder %s13, 0
    %p100 = por %p98, %p99
    %p101 = scmp.ne.s32.totalorder %s87, %s88
    %p102 = scmp.eq.s32.totalorder %s14, 1
    %p103 = por %p101, %p102
    %p105 = scmp.ne.s32.totalorder %s88, %s104
    %p106 = scmp.eq.s32.totalorder %s14, 0
    %p107 = por %p105, %p106
    %p108 = scmp.le.s32.totalorder 1, %s8
    %p109 = scmp.lt.s32.totalorder %s8, 3
    %p110 = pnand %p108, %p109
    %p111 = pneg %p110
    // Predicated region
    $region9: #{tpu_custom_call.1} parent=5 // pred_check
      _
    $region10: #{tpu_custom_call.1} parent=5 // pred_check_branch
      %113 = sbr.rel (%p110) target = $region12
    $region11: #{tpu_custom_call.1} parent=5 // pred_region
      %s114 = ssub.s32 %s8, 1
    $region12: #{tpu_custom_call.1} parent=5 // pred_fallthru
      _
    %p115 = scmp.lt.s32.totalorder %s8, 2
    // Predicated region
    $region13: #{tpu_custom_call.1} parent=5 // pred_check
      %p116 = pneg %p115
    $region14: #{tpu_custom_call.1} parent=5 // pred_check_branch
      %118 = sbr.rel (%p116) target = $region16
    $region15: #{tpu_custom_call.1} parent=5 // pred_region
      // Predicated region
      $region17: #{tpu_custom_call.1} parent=15 // pred_check
        %p119 = pneg %p42
      $region18: #{tpu_custom_call.1} parent=15 // pred_check_branch
        %121 = sbr.rel (%p119) target = $region20
      $region19: #{tpu_custom_call.1} parent=15 // pred_region
        %p122 = scmp.lt.s32.totalorder %s15, 1
        %s123 = scalar_select %p122, %s15, 1
        %p124 = scmp.lt.s32.totalorder %s16, 0
        %s125 = scalar_select %p124, %s16, 0
        %s126 = sadd.s32 %s125, %s123
        %s127 = smul.addr %s126, 8
        %s128 = scalar_lea.vmem %s0, %s127
      $region20: #{tpu_custom_call.1} parent=15 // pred_fallthru
        _
      // Predicated region
      $region21: #{tpu_custom_call.1} parent=15 // pred_check
        %p129 = pneg %p68
      $region22: #{tpu_custom_call.1} parent=15 // pred_check_branch
        %131 = sbr.rel (%p129) target = $region24
      $region23: #{tpu_custom_call.1} parent=15 // pred_region
        %p132 = scmp.lt.s32.totalorder %s15, 1
        %s133 = scalar_select %p132, %s15, 1
        %s134 = smul.addr %s133, 8
        %s135 = scalar_lea.vmem %s1, %s134
      $region24: #{tpu_custom_call.1} parent=15 // pred_fallthru
        _
    $region16: #{tpu_custom_call.1} parent=5 // pred_fallthru
      _
    %p136 = scmp.le.s32.totalorder 1, %s8
    %p137 = scmp.lt.s32.totalorder %s8, 3
    %p138 = pnand %p136, %p137
    %p139 = pneg %p138
    // Predicated region
    $region25: #{tpu_custom_call.1} parent=5 // pred_check
      _
    $region26: #{tpu_custom_call.1} parent=5 // pred_check_branch
      %141 = sbr.rel (%p138) target = $region28
    $region27: #{tpu_custom_call.1} parent=5 // pred_region
      %s142 = ssub.s32 %s8, 1
      %p143 = scmp.lt.s32.totalorder %s17, 1
      %s144 = scalar_select %p143, %s17, 1
      %p145 = scmp.lt.s32.totalorder %s18, 0
      %s146 = scalar_select %p145, %s18, 0
      %s147 = sadd.s32 %s146, %s144
      %s148 = smul.addr %s147, 8
      %s149 = scalar_lea.vmem %s0, %s148
      %p150 = pneg %p48
      %p151 = pneg %p45
      %p152 = scmp.lt.s32.totalorder %s17, 1
      %s153 = scalar_select %p152, %s17, 1
      %s154 = smul.addr %s153, 8
      %s155 = scalar_lea.vmem %s1, %s154
      %p156 = pneg %p74
      %p157 = pneg %p71
      %p158 = pneg %p100
      %p159 = pneg %p97
      %p160 = scmp.lt.s32.totalorder %s17, 1
      %s161 = scalar_select %p160, %s17, 1
      %s162 = smul.addr %s161, 8
      %s163 = scalar_lea.vmem %s2, %s162
      %p164 = scmp.lt.s32.totalorder %s17, 1
      %s165 = scalar_select %p164, %s17, 1
      %p166 = scmp.lt.s32.totalorder %s18, 0
      %s167 = scalar_select %p166, %s18, 0
      %s168 = sadd.s32 %s167, %s165
      %s169 = smul.addr %s168, 8
      %s170 = scalar_lea.vmem %s0, %s169
      %p171 = scmp.lt.s32.totalorder %s17, 1
      %s172 = scalar_select %p171, %s17, 1
      %s173 = smul.addr %s172, 8
      %s174 = scalar_lea.vmem %s1, %s173
      %p175 = scmp.lt.s32.totalorder %s17, 1
      %s176 = scalar_select %p175, %s17, 1
      %s177 = smul.addr %s176, 8
      %s178 = scalar_lea.vmem %s2, %s177
      %p179 = scmp.eq.s32.totalorder %s18, 0
      // Predicated region
      $region29: #{tpu_custom_call.1} parent=27 // pred_check
        %p180 = pneg %p179
      $region30: #{tpu_custom_call.1} parent=27 // pred_check_branch
        %182 = sbr.rel (%p180) target = $region32
      $region31: #{tpu_custom_call.1} parent=27 // pred_region
        %vm183 = vcmask 7168
        %184 = vst.msk [vmem:[#allocation2] sm:$0xff] %vm183, -inf
        %185 = vst.msk [vmem:[#allocation3] sm:$0xff] %vm183, 0.0
      $region32: #{tpu_custom_call.1} parent=27 // pred_fallthru
        _
      %v186 = vld [vmem:[%s170] sm:$0xff]
      %187 = vmax.xlane.f32.xlu0 %v186
      %v188 = vpop.xlane.xlu0 %187
      %v189 = vld [vmem:[#allocation2] sm:$0xff]
      %v190 = vmax.f32 %v189, %v188
      %v191 = vld [vmem:[#allocation3] sm:$0xff]
      %v192 = vsub.f32 %v189, %v190
      %v193 = vmul.f32 %v192, 1.442695
      %v194 = vpow.pop %v193
      %v195 = vmul.f32 %v191, %v194
      %197 = vset.pattern.permute.xlu0 0
      %198 = vperm.xlu0 %197, %v190
      %v199 = vpop.permute.xlu0 %198
      %v201 = vsub.f32 %v186, %v199
      %v202 = vmul.f32 %v201, 1.442695
      %v203 = vpow.pop %v202
      %204 = vadd.xlane.f32.xlu0 %v203
      %v205 = vpop.xlane.xlu0 %204
      %v206 = vadd.f32 %v195, %v205
      %vm207 = vcmask 7168
      %208 = vst.msk [vmem:[#allocation3] sm:$0xff] %vm207, %v206
      %209 = vst.msk [vmem:[#allocation2] sm:$0xff] %vm207, %v190
      // Predicated region
      $region33: #{tpu_custom_call.1} parent=27 // pred_check
        %p210 = pneg %p179
      $region34: #{tpu_custom_call.1} parent=27 // pred_check_branch
        %212 = sbr.rel (%p210) target = $region36
      $region35: #{tpu_custom_call.1} parent=27 // pred_region
        %v213 = vld [vmem:[#allocation3] sm:$0xff]
        %v214 = vlog2.pop %v213
        %v215 = vmul.f32 %v214, 0.6931472
        %v216 = vld [vmem:[#allocation2] sm:$0xff]
        %v217 = vadd.f32 %v215, %v216
        %v218 = vld [vmem:[%s174] sm:$0xff]
        %v219 = vsub.f32 %v217, %v218
        %220 = vst.msk [vmem:[%s178] sm:$0xff] %vm207, %v219
      $region36: #{tpu_custom_call.1} parent=27 // pred_fallthru
        _
      %p221 = scmp.lt.s32.totalorder %s17, 1
      %s222 = scalar_select %p221, %s17, 1
      %s223 = smul.addr %s222, 8
      %s224 = scalar_lea.vmem %s2, %s223
      // Predicated region
      $region37: #{tpu_custom_call.1} parent=27 // pred_check
        %p225 = pneg %p97
      $region38: #{tpu_custom_call.1} parent=27 // pred_check_branch
        %227 = sbr.rel (%p225) target = $region40
      $region39: #{tpu_custom_call.1} parent=27 // pred_region
        _
      $region40: #{tpu_custom_call.1} parent=27 // pred_fallthru
        _
    $region28: #{tpu_custom_call.1} parent=5 // pred_fallthru
      _
    %p228 = scmp.le.s32.totalorder 2, %s8
    // Predicated region
    $region41: #{tpu_custom_call.1} parent=5 // pred_check
      %p229 = pneg %p228
    $region42: #{tpu_custom_call.1} parent=5 // pred_check_branch
      %231 = sbr.rel (%p229) target = $region44
    $region43: #{tpu_custom_call.1} parent=5 // pred_region
      %s232 = ssub.s32 %s8, 2
      // Predicated region
      $region45: #{tpu_custom_call.1} parent=43 // pred_check
        %p233 = pneg %p103
      $region46: #{tpu_custom_call.1} parent=43 // pred_check_branch
        %235 = sbr.rel (%p233) target = $region48
      $region47: #{tpu_custom_call.1} parent=43 // pred_region
        %p236 = scmp.lt.s32.totalorder %s19, 1
        %s237 = scalar_select %p236, %s19, 1
        %s238 = smul.addr %s237, 8
        %s239 = scalar_lea.vmem %s2, %s238
      $region48: #{tpu_custom_call.1} parent=43 // pred_fallthru
        _
    $region44: #{tpu_custom_call.1} parent=5 // pred_fallthru
      _
  $region6: #{tpu_custom_call.1} parent=0 // loop_footer
    %s12 = sadd.s32 1, %s8
  $region7: #{tpu_custom_call.1} parent=0 // loop_footer_branch
    %7 = sbr.rel target = $region3
  $region8: #{tpu_custom_call.1} parent=0 // loop_exit
    _

</llo_original>
